<compile_context>
chip_gen: v5e
topology: v5e:2x2
jax: 0.10.0
libtpu: 0.0.40
codegen_flags: <defaults>
</compile_context>

<pallas_src>
import functools

import jax
import jax.numpy as jnp
from jax.experimental import pallas as pl
from jax.experimental.pallas import tpu as pltpu

BN_EPS = 1e-5


def _classifier_kernel(x_ref, wc_ref, gb_ref, wlt_ref, lb_ref, out_ref,
                       sum_acc, sq_acc, y_cache, *,
                       tile_n, cin, cout, classes, hw, n_valid, use_cache):
    # x_ref   : (TILE_N, Cin, HW)   batch tile, lane axis = HW
    # wc_ref  : (Cout, Cin)         1x1 conv weight
    # gb_ref  : (Cout, 2)           col0 = BN gamma, col1 = BN beta
    # wlt_ref : (Cout, Classes)     linear weight, pre-transposed in wrapper
    # lb_ref  : (1, Classes)        linear bias row
    # out_ref : (TILE_N, Classes)   lane-dense softmax output block
    # sum_acc / sq_acc : (1, Cout, 1) f32 scratch (persist over grid)
    # y_cache : (N_pad, Cout, HW) f32 scratch (resident conv output) or dummy
    p = pl.program_id(0)   # 0 = BN batch-stats pass, 1 = apply pass
    t = pl.program_id(1)   # batch tile index

    def conv_tile():
        # 1x1 conv == channel contraction.  Conv bias intentionally omitted:
        # a per-channel constant shift cancels exactly in (y - batch_mean) of
        # train-mode BatchNorm.
        x = x_ref[...]                                       # (TILE_N, Cin, HW)
        wc = wc_ref[...]                                     # (Cout, Cin)
        if cin <= 8:
            # MXU would be <1% utilized at K=Cin<=8; use Cin VPU broadcast-FMAs
            # on the lane-dense (TILE_N, Cout, HW) tile instead.
            y = wc[:, 0:1][None, :, :] * x[:, 0:1, :]
            for c in range(1, cin):
                y = y + wc[:, c:c + 1][None, :, :] * x[:, c:c + 1, :]
            return y.astype(jnp.float32)
        # General path: one MXU contraction over Cin covers TILE_N*HW lanes.
        y = jax.lax.dot_general(wc, x,
                                dimension_numbers=(((1,), (1,)), ((), ())),
                                preferred_element_type=jnp.float32)
        return jnp.transpose(y, (1, 0, 2))                   # (TILE_N, Cout, HW)

    @pl.when(jnp.logical_and(p == 0, t == 0))
    def _init():
        sum_acc[...] = jnp.zeros_like(sum_acc)
        sq_acc[...] = jnp.zeros_like(sq_acc)

    @pl.when(p == 0)
    def _stats_pass():
        y = conv_tile()                                      # (TILE_N, Cout, HW)
        if use_cache:
            start = pl.multiple_of(t * tile_n, tile_n)
            y_cache[pl.ds(start, tile_n)] = y
        # Single-pass batch statistics: per-channel sum and sum of squares.
        # TODO(synk): E[y^2]-E[y]^2 is cancellation-prone in f32 when
        # |mean| >> std; switch to a shifted / two-pass variance for real data.
        sum_acc[...] += jnp.sum(jnp.sum(y, axis=2, keepdims=True),
                                axis=0, keepdims=True)
        sq_acc[...] += jnp.sum(jnp.sum(y * y, axis=2, keepdims=True),
                               axis=0, keepdims=True)

    @pl.when(p == 1)
    def _apply_pass():
        if use_cache:
            start = pl.multiple_of(t * tile_n, tile_n)
            y = y_cache[pl.ds(start, tile_n)]                # (TILE_N, Cout, HW)
        else:
            y = conv_tile()                                  # fallback: recompute

        gb = gb_ref[...]                                     # (Cout, 2)
        gamma = gb[:, 0:1][None]                             # (1, Cout, 1)
        beta = gb[:, 1:2][None]                              # (1, Cout, 1)

        inv_count = 1.0 / float(n_valid * hw)
        mu = sum_acc[...] * inv_count                        # (1, Cout, 1)
        var = jnp.maximum(sq_acc[...] * inv_count - mu * mu, 0.0)  # biased var
        scale = jax.lax.rsqrt(var + BN_EPS) * gamma          # fold BN affine
        shift = beta - mu * scale

        a = jnp.maximum(y * scale + shift, 0.0)              # BN + ReLU
        # AdaptiveAvgPool2d(1) BEFORE the Linear layer (they commute): cuts the
        # second matmul from (Classes,Cout)@(Cout,HW) down to per-tile
        # (TILE_N,Cout)@(Cout,Classes).
        pooled = jnp.sum(a, axis=2) * (1.0 / hw)             # (TILE_N, Cout)
        logits = jnp.dot(pooled, wlt_ref[...],
                         preferred_element_type=jnp.float32) + lb_ref[...]

        # Softmax over the lane (class) axis; exact division (no approx recip).
        m = jnp.max(logits, axis=1, keepdims=True)
        e = jnp.exp(logits - m)
        out_ref[...] = e / jnp.sum(e, axis=1, keepdims=True)


def classifier_forward(x_nchw, params):
    """x_nchw: (N, Cin, H, W) float32. Returns (N, Classes) softmax probs."""
    N, Cin, H, W = x_nchw.shape
    conv_w, conv_b, bn_g, bn_b, lin_w, lin_b = params
    del conv_b  # cancels exactly under training-mode BatchNorm (see kernel)
    Cout = conv_w.shape[0]
    Classes = lin_w.shape[0]
    HW = H * W

    # ---- batch tile sizing: ~2 MiB for the larger of the x / y per-step tile.
    per_elem = max(Cin, Cout) * HW * 4
    tile_n = max(1, (2 << 20) // per_elem)
    if tile_n >= N:
        tile_n = N
    else:
        tile_n = max(8, (tile_n // 8) * 8)   # keep output block sublane-aligned
    num_tiles = -(-N // tile_n)
    n_pad = num_tiles * tile_n

    # NCHW -> (N, Cin, H*W): free reshape, no host transpose.  Zero-pad the
    # batch: zero inputs give zero conv output (no bias), so the BN batch
    # statistics stay exact when divided by the true N*HW.
    x_kern = x_nchw.reshape(N, Cin, HW).astype(jnp.float32)
    if n_pad != N:
        x_kern = jnp.pad(x_kern, ((0, n_pad - N), (0, 0), (0, 0)))

    wc = conv_w[:, :, 0, 0].astype(jnp.float32)              # (Cout, Cin)
    wlt = lin_w.astype(jnp.float32).T                        # (Cout, Classes)
    gb = jnp.stack([bn_g.astype(jnp.float32),
                    bn_b.astype(jnp.float32)], axis=1)       # (Cout, 2)
    lb = lin_b.astype(jnp.float32).reshape(1, Classes)       # (1, Classes)

    # ---- VMEM budget: keep y = conv(x) resident across both passes when it
    # fits (x is then read from HBM exactly once).  Budget against v7x's
    # 64 MiB physical VMEM; v5e/v6e (128 MiB) are strictly easier.
    xblock = tile_n * Cin * HW * 4
    yblock = tile_n * Cout * HW * 4
    ycache = n_pad * Cout * HW * 4
    use_cache = ycache <= (40 << 20)
    vmem_need = 2 * xblock + 3 * yblock + (ycache if use_cache else 0) + (4 << 20)
    vmem_limit = int(min(max(vmem_need, 32 << 20), 96 << 20))

    if use_cache:
        x_index = lambda p, t: ((1 - p) * t, 0, 0)   # pass 1 never re-reads x
        cache_shape = (n_pad, Cout, HW)
    else:
        x_index = lambda p, t: (t, 0, 0)             # fallback: re-read + reconv
        cache_shape = (8, 8, 128)                    # dummy, never touched

    kernel = functools.partial(
        _classifier_kernel, tile_n=tile_n, cin=Cin, cout=Cout,
        classes=Classes, hw=HW, n_valid=N, use_cache=use_cache)

    out = pl.pallas_call(
        kernel,
        grid=(2, num_tiles),   # (pass, batch tile)
        in_specs=[
            pl.BlockSpec((tile_n, Cin, HW), x_index),            # x tile
            pl.BlockSpec((Cout, Cin), lambda p, t: (0, 0)),       # conv weight
            pl.BlockSpec((Cout, 2), lambda p, t: (0, 0)),         # BN gamma/beta
            pl.BlockSpec((Cout, Classes), lambda p, t: (0, 0)),   # linear W^T
            pl.BlockSpec((1, Classes), lambda p, t: (0, 0)),      # linear bias
        ],
        # Output block index stays 0 during pass 0 (no garbage writebacks);
        # pass 1 writes one lane-dense (TILE_N, Classes) block per batch tile.
        out_specs=pl.BlockSpec((tile_n, Classes), lambda p, t: (p * t, 0)),
        out_shape=jax.ShapeDtypeStruct((n_pad, Classes), jnp.float32),
        scratch_shapes=[
            pltpu.VMEM((1, Cout, 1), jnp.float32),   # per-channel sum
            pltpu.VMEM((1, Cout, 1), jnp.float32),   # per-channel sum of squares
            pltpu.VMEM(cache_shape, jnp.float32),    # resident conv output y
        ],
        compiler_params=pltpu.CompilerParams(
            # BN batch stats flow through shared scratch across the batch axis,
            # so both grid axes stay sequential on one TensorCore.
            dimension_semantics=("arbitrary", "arbitrary"),
            vmem_limit_bytes=vmem_limit),
    )(x_kern, wc, gb, wlt, lb)

    return out[:N]


def init_params(key, Classes, cls_embed_dim):
    """Deterministic synthetic parameters matching nn.Module shapes."""
    k1, k2, k3, k4 = jax.random.split(key, 4)
    conv_w = jax.random.normal(k1, (32, cls_embed_dim, 1, 1), jnp.float32) * 0.2
    conv_b = jax.random.normal(k2, (32,), jnp.float32) * 0.05
    bn_g = 1.0 + 0.1 * jnp.arange(32, dtype=jnp.float32) / 32.0
    bn_b = 0.01 * jnp.arange(32, dtype=jnp.float32)
    lin_w = jax.random.normal(k3, (Classes, 32), jnp.float32) * 0.2
    lin_b = jax.random.normal(k4, (Classes,), jnp.float32) * 0.05
    return conv_w, conv_b, bn_g, bn_b, lin_w, lin_b


def reference_forward(x, params):
    """Pure-JAX reference matching the PyTorch module (train-mode BN)."""
    conv_w, conv_b, bn_g, bn_b, lin_w, lin_b = params
    y = jnp.einsum('nchw,oc->nohw', x, conv_w[:, :, 0, 0]) \
        + conv_b[None, :, None, None]
    mu = jnp.mean(y, axis=(0, 2, 3), keepdims=True)
    var = jnp.mean((y - mu) ** 2, axis=(0, 2, 3), keepdims=True)  # biased
    y = (y - mu) / jnp.sqrt(var + BN_EPS) * bn_g[None, :, None, None] \
        + bn_b[None, :, None, None]
    y = jnp.maximum(y, 0.0)
    pooled = jnp.mean(y, axis=(2, 3))
    logits = pooled @ lin_w.T + lin_b
    return jax.nn.softmax(logits, axis=1)


if __name__ == "__main__":
    Classes = 8
    cls_embed_dim = 4
    N, H, W = 2, 16, 16

    key = jax.random.PRNGKey(0)
    kx, kp = jax.random.split(key)
    x = jax.random.normal(kx, (N, cls_embed_dim, H, W), jnp.float32)
    params = init_params(kp, Classes, cls_embed_dim)

    out = jax.block_until_ready(classifier_forward(x, params))
    ref = reference_forward(x, params)

    assert out.shape == (N, Classes)
    assert jnp.allclose(jnp.sum(out, axis=1), 1.0, atol=1e-5)
    assert jnp.allclose(out, ref, atol=1e-4)
    print("KERNEL_OK")
</pallas_src>

<mosaic_0001>
module attributes {stable_mosaic.version = 11 : i64} {
  func.func @_classifier_kernel(%arg0: i32, %arg1: i32, %arg2: memref<2x4x256xf32, #tpu.memory_space<vmem>>, %arg3: memref<32x4xf32, #tpu.memory_space<vmem>>, %arg4: memref<32x2xf32, #tpu.memory_space<vmem>>, %arg5: memref<32x8xf32, #tpu.memory_space<vmem>>, %arg6: memref<1x8xf32, #tpu.memory_space<vmem>>, %arg7: memref<2x8xf32, #tpu.memory_space<vmem>>, %arg8: memref<1x32x1xf32, #tpu.memory_space<vmem>>, %arg9: memref<1x32x1xf32, #tpu.memory_space<vmem>>, %arg10: memref<2x32x256xf32, #tpu.memory_space<vmem>>) attributes {dimension_semantics = [#tpu.dimension_semantics<arbitrary>, #tpu.dimension_semantics<arbitrary>], iteration_bounds = array<i64: 2, 1>, scalar_prefetch = 0 : i64, scratch_operands = 3 : i64, tpu.core_type = #tpu.core_type<tc>, window_params = [{transform_indices = @transform_0, window_bounds = array<i64: 2, 4, 256>}, {pipeline_mode = #tpu.pipeline_mode<synchronous>, transform_indices = @transform_1, window_bounds = array<i64: 32, 4>}, {pipeline_mode = #tpu.pipeline_mode<synchronous>, transform_indices = @transform_2, window_bounds = array<i64: 32, 2>}, {pipeline_mode = #tpu.pipeline_mode<synchronous>, transform_indices = @transform_3, window_bounds = array<i64: 32, 8>}, {pipeline_mode = #tpu.pipeline_mode<synchronous>, transform_indices = @transform_4, window_bounds = array<i64: 1, 8>}, {transform_indices = @transform_5, window_bounds = array<i64: 2, 8>}]} {
    %c0_i32 = arith.constant 0 : i32
    %0 = arith.cmpi eq, %arg0, %c0_i32 : i32
    %c0_i32_0 = arith.constant 0 : i32
    %1 = arith.cmpi eq, %arg1, %c0_i32_0 : i32
    %2 = arith.andi %0, %1 : i1
    %3 = arith.extui %2 : i1 to i32
    %c0_i32_1 = arith.constant 0 : i32
    %4 = arith.cmpi ne, %3, %c0_i32_1 : i32
    scf.if %4 {
      %cst = arith.constant 0.000000e+00 : f32
      %11 = vector.broadcast %cst : f32 to vector<1x32x1xf32>
      %c0 = arith.constant 0 : index
      %c0_5 = arith.constant 0 : index
      %c0_6 = arith.constant 0 : index
      %12 = vector.load %arg8[%c0, %c0_5, %c0_6] : memref<1x32x1xf32, #tpu.memory_space<vmem>>, vector<1x32x1xf32>
      tpu.vector_store %arg8[%c0, %c0_5, %c0_6], %11 {strides = array<i32>} : memref<1x32x1xf32, #tpu.memory_space<vmem>>, vector<1x32x1xf32>,
      %cst_7 = arith.constant 0.000000e+00 : f32
      %13 = vector.broadcast %cst_7 : f32 to vector<1x32x1xf32>
      %c0_8 = arith.constant 0 : index
      %c0_9 = arith.constant 0 : index
      %c0_10 = arith.constant 0 : index
      %14 = vector.load %arg9[%c0_8, %c0_9, %c0_10] : memref<1x32x1xf32, #tpu.memory_space<vmem>>, vector<1x32x1xf32>
      tpu.vector_store %arg9[%c0_8, %c0_9, %c0_10], %13 {strides = array<i32>} : memref<1x32x1xf32, #tpu.memory_space<vmem>>, vector<1x32x1xf32>,
    } else {
    }
    %c0_i32_2 = arith.constant 0 : i32
    %5 = arith.cmpi eq, %arg0, %c0_i32_2 : i32
    %6 = arith.extui %5 : i1 to i32
    %c0_i32_3 = arith.constant 0 : i32
    %7 = arith.cmpi ne, %6, %c0_i32_3 : i32
    scf.if %7 {
      %c0 = arith.constant 0 : index
      %c0_5 = arith.constant 0 : index
      %c0_6 = arith.constant 0 : index
      %11 = vector.load %arg2[%c0, %c0_5, %c0_6] : memref<2x4x256xf32, #tpu.memory_space<vmem>>, vector<2x4x256xf32>
      %c0_7 = arith.constant 0 : index
      %c0_8 = arith.constant 0 : index
      %12 = vector.load %arg3[%c0_7, %c0_8] : memref<32x4xf32, #tpu.memory_space<vmem>>, vector<32x4xf32>
      %13 = vector.extract_strided_slice %12 {offsets = [0, 0], sizes = [32, 1], strides = [1, 1]} : vector<32x4xf32> to vector<32x1xf32>
      %14 = vector.shape_cast %13 : vector<32x1xf32> to vector<1x32x1xf32>
      %15 = vector.extract_strided_slice %11 {offsets = [0, 0, 0], sizes = [2, 1, 256], strides = [1, 1, 1]} : vector<2x4x256xf32> to vector<2x1x256xf32>
      %16 = vector.broadcast %14 : vector<1x32x1xf32> to vector<2x32x256xf32>
      %17 = vector.broadcast %15 : vector<2x1x256xf32> to vector<2x32x256xf32>
      %18 = arith.mulf %16, %17 : vector<2x32x256xf32>
      %19 = vector.extract_strided_slice %12 {offsets = [0, 1], sizes = [32, 1], strides = [1, 1]} : vector<32x4xf32> to vector<32x1xf32>
      %20 = vector.shape_cast %19 : vector<32x1xf32> to vector<1x32x1xf32>
      %21 = vector.extract_strided_slice %11 {offsets = [0, 1, 0], sizes = [2, 1, 256], strides = [1, 1, 1]} : vector<2x4x256xf32> to vector<2x1x256xf32>
      %22 = vector.broadcast %20 : vector<1x32x1xf32> to vector<2x32x256xf32>
      %23 = vector.broadcast %21 : vector<2x1x256xf32> to vector<2x32x256xf32>
      %24 = arith.mulf %22, %23 : vector<2x32x256xf32>
      %25 = arith.addf %18, %24 : vector<2x32x256xf32>
      %26 = vector.extract_strided_slice %12 {offsets = [0, 2], sizes = [32, 1], strides = [1, 1]} : vector<32x4xf32> to vector<32x1xf32>
      %27 = vector.shape_cast %26 : vector<32x1xf32> to vector<1x32x1xf32>
      %28 = vector.extract_strided_slice %11 {offsets = [0, 2, 0], sizes = [2, 1, 256], strides = [1, 1, 1]} : vector<2x4x256xf32> to vector<2x1x256xf32>
      %29 = vector.broadcast %27 : vector<1x32x1xf32> to vector<2x32x256xf32>
      %30 = vector.broadcast %28 : vector<2x1x256xf32> to vector<2x32x256xf32>
      %31 = arith.mulf %29, %30 : vector<2x32x256xf32>
      %32 = arith.addf %25, %31 : vector<2x32x256xf32>
      %33 = vector.extract_strided_slice %12 {offsets = [0, 3], sizes = [32, 1], strides = [1, 1]} : vector<32x4xf32> to vector<32x1xf32>
      %34 = vector.shape_cast %33 : vector<32x1xf32> to vector<1x32x1xf32>
      %35 = vector.extract_strided_slice %11 {offsets = [0, 3, 0], sizes = [2, 1, 256], strides = [1, 1, 1]} : vector<2x4x256xf32> to vector<2x1x256xf32>
      %36 = vector.broadcast %34 : vector<1x32x1xf32> to vector<2x32x256xf32>
      %37 = vector.broadcast %35 : vector<2x1x256xf32> to vector<2x32x256xf32>
      %38 = arith.mulf %36, %37 : vector<2x32x256xf32>
      %39 = arith.addf %32, %38 : vector<2x32x256xf32>
      %c2_i32 = arith.constant 2 : i32
      %40 = arith.muli %arg1, %c2_i32 : i32
      %41 = tpu.assume_multiple %40, 2 : i32
      %42 = arith.index_cast %41 : i32 to index
      %c0_9 = arith.constant 0 : index
      %c0_10 = arith.constant 0 : index
      %43 = vector.load %arg10[%42, %c0_9, %c0_10] : memref<2x32x256xf32, #tpu.memory_space<vmem>>, vector<2x32x256xf32>
      tpu.vector_store %arg10[%42, %c0_9, %c0_10], %39 {strides = array<i32>} : memref<2x32x256xf32, #tpu.memory_space<vmem>>, vector<2x32x256xf32>,
      %c0_11 = arith.constant 0 : index
      %c0_12 = arith.constant 0 : index
      %c0_13 = arith.constant 0 : index
      %44 = vector.load %arg8[%c0_11, %c0_12, %c0_13] : memref<1x32x1xf32, #tpu.memory_space<vmem>>, vector<1x32x1xf32>
      %cst = arith.constant dense<0.000000e+00> : vector<2x32xf32>
      %45 = vector.multi_reduction <add>, %39, %cst [2] : vector<2x32x256xf32> to vector<2x32xf32>
      %46 = vector.shape_cast %45 : vector<2x32xf32> to vector<2x32x1xf32>
      %cst_14 = arith.constant dense<0.000000e+00> : vector<32x1xf32>
      %47 = vector.multi_reduction <add>, %46, %cst_14 [0] : vector<2x32x1xf32> to vector<32x1xf32>
      %48 = vector.shape_cast %47 : vector<32x1xf32> to vector<1x32x1xf32>
      %49 = arith.addf %44, %48 : vector<1x32x1xf32>
      %c0_15 = arith.constant 0 : index
      %c0_16 = arith.constant 0 : index
      %c0_17 = arith.constant 0 : index
      %50 = vector.load %arg8[%c0_15, %c0_16, %c0_17] : memref<1x32x1xf32, #tpu.memory_space<vmem>>, vector<1x32x1xf32>
      tpu.vector_store %arg8[%c0_15, %c0_16, %c0_17], %49 {strides = array<i32>} : memref<1x32x1xf32, #tpu.memory_space<vmem>>, vector<1x32x1xf32>,
      %c0_18 = arith.constant 0 : index
      %c0_19 = arith.constant 0 : index
      %c0_20 = arith.constant 0 : index
      %51 = vector.load %arg9[%c0_18, %c0_19, %c0_20] : memref<1x32x1xf32, #tpu.memory_space<vmem>>, vector<1x32x1xf32>
      %52 = arith.mulf %39, %39 : vector<2x32x256xf32>
      %cst_21 = arith.constant dense<0.000000e+00> : vector<2x32xf32>
      %53 = vector.multi_reduction <add>, %52, %cst_21 [2] : vector<2x32x256xf32> to vector<2x32xf32>
      %54 = vector.shape_cast %53 : vector<2x32xf32> to vector<2x32x1xf32>
      %cst_22 = arith.constant dense<0.000000e+00> : vector<32x1xf32>
      %55 = vector.multi_reduction <add>, %54, %cst_22 [0] : vector<2x32x1xf32> to vector<32x1xf32>
      %56 = vector.shape_cast %55 : vector<32x1xf32> to vector<1x32x1xf32>
      %57 = arith.addf %51, %56 : vector<1x32x1xf32>
      %c0_23 = arith.constant 0 : index
      %c0_24 = arith.constant 0 : index
      %c0_25 = arith.constant 0 : index
      %58 = vector.load %arg9[%c0_23, %c0_24, %c0_25] : memref<1x32x1xf32, #tpu.memory_space<vmem>>, vector<1x32x1xf32>
      tpu.vector_store %arg9[%c0_23, %c0_24, %c0_25], %57 {strides = array<i32>} : memref<1x32x1xf32, #tpu.memory_space<vmem>>, vector<1x32x1xf32>,
    } else {
    }
    %c1_i32 = arith.constant 1 : i32
    %8 = arith.cmpi eq, %arg0, %c1_i32 : i32
    %9 = arith.extui %8 : i1 to i32
    %c0_i32_4 = arith.constant 0 : i32
    %10 = arith.cmpi ne, %9, %c0_i32_4 : i32
    scf.if %10 {
      %c2_i32 = arith.constant 2 : i32
      %11 = arith.muli %arg1, %c2_i32 : i32
      %12 = tpu.assume_multiple %11, 2 : i32
      %13 = arith.index_cast %12 : i32 to index
      %c0 = arith.constant 0 : index
      %c0_5 = arith.constant 0 : index
      %14 = vector.load %arg10[%13, %c0, %c0_5] : memref<2x32x256xf32, #tpu.memory_space<vmem>>, vector<2x32x256xf32>
      %c0_6 = arith.constant 0 : index
      %c0_7 = arith.constant 0 : index
      %15 = vector.load %arg4[%c0_6, %c0_7] : memref<32x2xf32, #tpu.memory_space<vmem>>, vector<32x2xf32>
      %16 = vector.extract_strided_slice %15 {offsets = [0, 0], sizes = [32, 1], strides = [1, 1]} : vector<32x2xf32> to vector<32x1xf32>
      %17 = vector.shape_cast %16 : vector<32x1xf32> to vector<1x32x1xf32>
      %18 = vector.extract_strided_slice %15 {offsets = [0, 1], sizes = [32, 1], strides = [1, 1]} : vector<32x2xf32> to vector<32x1xf32>
      %19 = vector.shape_cast %18 : vector<32x1xf32> to vector<1x32x1xf32>
      %c0_8 = arith.constant 0 : index
      %c0_9 = arith.constant 0 : index
      %c0_10 = arith.constant 0 : index
      %20 = vector.load %arg8[%c0_8, %c0_9, %c0_10] : memref<1x32x1xf32, #tpu.memory_space<vmem>>, vector<1x32x1xf32>
      %cst = arith.constant 0.001953125 : f32
      %21 = vector.broadcast %cst : f32 to vector<1x32x1xf32>
      %22 = arith.mulf %20, %21 : vector<1x32x1xf32>
      %c0_11 = arith.constant 0 : index
      %c0_12 = arith.constant 0 : index
      %c0_13 = arith.constant 0 : index
      %23 = vector.load %arg9[%c0_11, %c0_12, %c0_13] : memref<1x32x1xf32, #tpu.memory_space<vmem>>, vector<1x32x1xf32>
      %cst_14 = arith.constant 0.001953125 : f32
      %24 = vector.broadcast %cst_14 : f32 to vector<1x32x1xf32>
      %25 = arith.mulf %23, %24 : vector<1x32x1xf32>
      %26 = arith.mulf %22, %22 : vector<1x32x1xf32>
      %27 = arith.subf %25, %26 : vector<1x32x1xf32>
      %cst_15 = arith.constant 0.000000e+00 : f32
      %28 = vector.broadcast %cst_15 : f32 to vector<1x32x1xf32>
      %29 = arith.maximumf %27, %28 : vector<1x32x1xf32>
      %cst_16 = arith.constant 9.99999974E-6 : f32
      %30 = vector.broadcast %cst_16 : f32 to vector<1x32x1xf32>
      %31 = arith.addf %29, %30 : vector<1x32x1xf32>
      %32 = math.rsqrt %31 : vector<1x32x1xf32>
      %33 = arith.mulf %32, %17 : vector<1x32x1xf32>
      %34 = arith.mulf %22, %33 : vector<1x32x1xf32>
      %35 = arith.subf %19, %34 : vector<1x32x1xf32>
      %36 = vector.broadcast %33 : vector<1x32x1xf32> to vector<2x32x256xf32>
      %37 = arith.mulf %14, %36 : vector<2x32x256xf32>
      %38 = vector.broadcast %35 : vector<1x32x1xf32> to vector<2x32x256xf32>
      %39 = arith.addf %37, %38 : vector<2x32x256xf32>
      %cst_17 = arith.constant 0.000000e+00 : f32
      %40 = vector.broadcast %cst_17 : f32 to vector<2x32x256xf32>
      %41 = arith.maximumf %39, %40 : vector<2x32x256xf32>
      %cst_18 = arith.constant dense<0.000000e+00> : vector<2x32xf32>
      %42 = vector.multi_reduction <add>, %41, %cst_18 [2] : vector<2x32x256xf32> to vector<2x32xf32>
      %cst_19 = arith.constant 3.906250e-03 : f32
      %43 = vector.broadcast %cst_19 : f32 to vector<2x32xf32>
      %44 = arith.mulf %42, %43 : vector<2x32xf32>
      %c0_20 = arith.constant 0 : index
      %c0_21 = arith.constant 0 : index
      %45 = vector.load %arg5[%c0_20, %c0_21] : memref<32x8xf32, #tpu.memory_space<vmem>>, vector<32x8xf32>
      %cst_22 = arith.constant dense<0.000000e+00> : vector<2x8xf32>
      %46 = tpu.matmul %44, %45, %cst_22 {dimension_numbers = #tpu.dot_dimension_numbers<[1], [0], [0], [1], [0, 0, 1, 1], [], []>} : vector<2x32xf32>, vector<32x8xf32>, vector<2x8xf32> -> vector<2x8xf32>
      %c0_23 = arith.constant 0 : index
      %c0_24 = arith.constant 0 : index
      %47 = vector.load %arg6[%c0_23, %c0_24] : memref<1x8xf32, #tpu.memory_space<vmem>>, vector<1x8xf32>
      %48 = vector.broadcast %47 : vector<1x8xf32> to vector<2x8xf32>
      %49 = arith.addf %46, %48 : vector<2x8xf32>
      %cst_25 = arith.constant dense<0xFF800000> : vector<2xf32>
      %50 = vector.multi_reduction <maximumf>, %49, %cst_25 [1] : vector<2x8xf32> to vector<2xf32>
      %51 = vector.shape_cast %50 : vector<2xf32> to vector<2x1xf32>
      %52 = vector.broadcast %51 : vector<2x1xf32> to vector<2x8xf32>
      %53 = arith.subf %49, %52 : vector<2x8xf32>
      %54 = math.exp %53 : vector<2x8xf32>
      %cst_26 = arith.constant dense<0.000000e+00> : vector<2xf32>
      %55 = vector.multi_reduction <add>, %54, %cst_26 [1] : vector<2x8xf32> to vector<2xf32>
      %56 = vector.shape_cast %55 : vector<2xf32> to vector<2x1xf32>
      %57 = vector.broadcast %56 : vector<2x1xf32> to vector<2x8xf32>
      %58 = arith.divf %54, %57 : vector<2x8xf32>
      %c0_27 = arith.constant 0 : index
      %c0_28 = arith.constant 0 : index
      %59 = vector.load %arg7[%c0_27, %c0_28] : memref<2x8xf32, #tpu.memory_space<vmem>>, vector<2x8xf32>
      tpu.vector_store %arg7[%c0_27, %c0_28], %58 {strides = array<i32>} : memref<2x8xf32, #tpu.memory_space<vmem>>, vector<2x8xf32>,
    } else {
    }
    return
  }
  func.func @transform_0(%arg0: i32, %arg1: i32) -> (i32, i32, i32) {
    %c1_i32 = arith.constant 1 : i32
    %0 = arith.subi %c1_i32, %arg0 : i32
    %1 = arith.muli %0, %arg1 : i32
    %c0_i32 = arith.constant 0 : i32
    %c0_i32_0 = arith.constant 0 : i32
    %c0_i32_1 = arith.constant 0 : i32
    return %1, %c0_i32, %c0_i32_0 : i32, i32, i32
  }
  func.func @transform_1(%arg0: i32, %arg1: i32) -> (i32, i32) {
    %c0_i32 = arith.constant 0 : i32
    %c0_i32_0 = arith.constant 0 : i32
    %c0_i32_1 = arith.constant 0 : i32
    return %c0_i32, %c0_i32_0 : i32, i32
  }
  func.func @transform_2(%arg0: i32, %arg1: i32) -> (i32, i32) {
    %c0_i32 = arith.constant 0 : i32
    %c0_i32_0 = arith.constant 0 : i32
    %c0_i32_1 = arith.constant 0 : i32
    return %c0_i32, %c0_i32_0 : i32, i32
  }
  func.func @transform_3(%arg0: i32, %arg1: i32) -> (i32, i32) {
    %c0_i32 = arith.constant 0 : i32
    %c0_i32_0 = arith.constant 0 : i32
    %c0_i32_1 = arith.constant 0 : i32
    return %c0_i32, %c0_i32_0 : i32, i32
  }
  func.func @transform_4(%arg0: i32, %arg1: i32) -> (i32, i32) {
    %c0_i32 = arith.constant 0 : i32
    %c0_i32_0 = arith.constant 0 : i32
    %c0_i32_1 = arith.constant 0 : i32
    return %c0_i32, %c0_i32_0 : i32, i32
  }
  func.func @transform_5(%arg0: i32, %arg1: i32) -> (i32, i32) {
    %0 = arith.muli %arg0, %arg1 : i32
    %c0_i32 = arith.constant 0 : i32
    %c0_i32_0 = arith.constant 0 : i32
    return %0, %c0_i32 : i32, i32
  }
}

</mosaic_0001>

<llo_original>
// kernel: tpu_custom_call.1
$region0: #{tpu_custom_call.1}
  #allocation0 [shape = 'u32[]', space=smem, size = 0x4, offset = 0x4, fixed_abs, tag = 'smem constant byte address 0x4 - core index']
  #allocation1 [shape = 'u32[72,128]{1,0:T(1,128)}', space=vmem, size = 0x9000, scoped, tag = 'internal scratch']
  #allocation2 [shape = 'f32[1,32,1]{2,1,0:T(8,128)}', space=vmem, size = 0x4000, scoped, tag = 'scratch operand']
  #allocation3 [shape = 'f32[1,32,1]{2,1,0:T(8,128)}', space=vmem, size = 0x4000, scoped, tag = 'scratch operand']
  #allocation4 [shape = 'f32[2,32,256]{2,1,0:T(8,128)}', space=vmem, size = 0x10000, scoped, tag = 'scratch operand']
  %s0 = inlined_call_operand.vmem [shape: f32[2,4,256], index: 0, kind: input, shape index: {}]
  %s1 = inlined_call_operand.vmem [shape: f32[32,4], index: 1, kind: input, shape index: {}]
  %s2 = inlined_call_operand.vmem [shape: f32[32,2], index: 2, kind: input, shape index: {}]
  %s3 = inlined_call_operand.vmem [shape: f32[32,8], index: 3, kind: input, shape index: {}]
  %s4 = inlined_call_operand.vmem [shape: f32[1,8], index: 4, kind: input, shape index: {}]
  %s5 = inlined_call_operand.hbm [shape: f32[2,8], index: 5, kind: output, shape index: {}]
  %s6 = sld [smem:[#allocation0]]
  $region65: #{tpu_custom_call.1} parent=0
    _
  %s8 = ssub.s32 1, %s6
  %s9 = scalar_select 0, %s8, %s6
  $region1: #{tpu_custom_call.1} parent=0
    #allocation5 [shape = 'u8[2048]{0}', space=vmem, size = 0x800, scoped, tag = 'output window, operand 0']
    #allocation6 [shape = 's32[2]{0}', space=sflag, size = 0x8, scoped, tag = 'scoped memory for tpu_custom_call.1']
    %10 = vsyncpa [#allocation6], 0
    %s11 = scalar_lea.sflag [#allocation6], 1
    %12 = vsyncpa %s11, 0
    loop: start=0, step=1, limit=4
    $region2: #{tpu_custom_call.1} parent=1 // loop_pre_header
      _
    $region3: #{tpu_custom_call.1} parent=1 // loop_header
      %s14 = sphi 0, %s18
      %p15 = scmp.ge.s32.totalorder %s14, 4
      %s21 = sphi 0, %s33
      %s22 = sphi 0, %s29
      %s23 = sphi 0, %s21
      %s24 = sphi 0, %s22
      %s25 = sphi 0, %s23
      %s26 = sphi 0, %s24
      %s40 = sphi 0, %s42
      %s43 = sphi 0, %s40
      %s44 = sphi 0, %s43
      %s60 = sphi 0, %s44
      %s64 = sphi 0, %s64
      %s66 = sphi 0, %s64
      %s67 = sphi 0, %s66
      %s81 = sphi 0, %s67
      %s85 = sphi 0, %s85
      %s87 = sphi 0, %s85
      %s88 = sphi 0, %s87
      %s102 = sphi 0, %s88
      %s106 = sphi 0, %s106
      %s108 = sphi 0, %s106
      %s109 = sphi 0, %s108
      %s123 = sphi 0, %s109
      %s127 = sphi 0, %s127
      %s129 = sphi 0, %s127
      %s130 = sphi 0, %s129
      %s144 = sphi 0, %s130
      %s152 = sphi 0, %s154
      %s155 = sphi 0, %s152
      %s156 = sphi 0, %s155
      %s172 = sphi 0, %s156
    $region4: #{tpu_custom_call.1} parent=1 // loop_header_branch
      %17 = sbr.rel (%p15) target = $region8
    $region5: #{tpu_custom_call.1} parent=1 // loop_body
      %s19 = ssub.s32 %s14, 1
      %s20 = ssub.s32 %s14, 2
      %s27 = sadd.s32 1, %s22
      %p28 = scmp.ge.s32.totalorder %s27, 1
      %s29 = scalar_select %p28, 0, %s27
      %s30 = sadd.s32 1, %s21
      %s31 = scalar_select %p28, %s30, %s21
      %p32 = scmp.ge.s32.totalorder %s31, 2
      %s33 = scalar_select %p32, 0, %s31
      %s34 = ssub.s32 1, %s21
      %s35 = smul.u32 %s34, %s22
      %s36 = ssub.s32 1, %s33
      %s37 = smul.u32 %s36, %s29
      %s38 = ssub.s32 %s35, %s37
      %p39 = scmp.eq.s32.totalorder %s38, 0
      %s41 = sadd.s32 %s40, 1
      %s42 = scalar_select %p39, %s40, %s41
      %p45 = pneg %p39
      %p46 = scmp.eq.s32.totalorder %s14, 1
      %p47 = por %p45, %p46
      %p48 = scmp.ne.s32.totalorder %s40, %s43
      %p49 = scmp.eq.s32.totalorder %s14, 0
      %p50 = por %p48, %p49
      %p51 = scmp.ne.s32.totalorder %s40, %s43
      %p52 = scmp.eq.s32.totalorder %s19, 1
      %p53 = por %p51, %p52
      %p54 = scmp.ne.s32.totalorder %s43, %s44
      %p55 = scmp.eq.s32.totalorder %s19, 0
      %p56 = por %p54, %p55
      %p57 = scmp.ne.s32.totalorder %s43, %s44
      %p58 = scmp.eq.s32.totalorder %s20, 1
      %p59 = por %p57, %p58
      %p61 = scmp.ne.s32.totalorder %s44, %s60
      %p62 = scmp.eq.s32.totalorder %s20, 0
      %p63 = por %p61, %p62
      %s65 = sadd.s32 %s64, 1
      %p68 = scmp.eq.s32.totalorder %s14, 1
      %p69 = scmp.ne.s32.totalorder %s64, %s66
      %p70 = scmp.eq.s32.totalorder %s14, 0
      %p71 = por %p69, %p70
      %p72 = scmp.ne.s32.totalorder %s64, %s66
      %p73 = scmp.eq.s32.totalorder %s19, 1
      %p74 = por %p72, %p73
      %p75 = scmp.ne.s32.totalorder %s66, %s67
      %p76 = scmp.eq.s32.totalorder %s19, 0
      %p77 = por %p75, %p76
      %p78 = scmp.ne.s32.totalorder %s66, %s67
      %p79 = scmp.eq.s32.totalorder %s20, 1
      %p80 = por %p78, %p79
      %p82 = scmp.ne.s32.totalorder %s67, %s81
      %p83 = scmp.eq.s32.totalorder %s20, 0
      %p84 = por %p82, %p83
      %s86 = sadd.s32 %s85, 1
      %p89 = scmp.eq.s32.totalorder %s14, 1
      %p90 = scmp.ne.s32.totalorder %s85, %s87
      %p91 = scmp.eq.s32.totalorder %s14, 0
      %p92 = por %p90, %p91
      %p93 = scmp.ne.s32.totalorder %s85, %s87
      %p94 = scmp.eq.s32.totalorder %s19, 1
      %p95 = por %p93, %p94
      %p96 = scmp.ne.s32.totalorder %s87, %s88
      %p97 = scmp.eq.s32.totalorder %s19, 0
      %p98 = por %p96, %p97
      %p99 = scmp.ne.s32.totalorder %s87, %s88
      %p100 = scmp.eq.s32.totalorder %s20, 1
      %p101 = por %p99, %p100
      %p103 = scmp.ne.s32.totalorder %s88, %s102
      %p104 = scmp.eq.s32.totalorder %s20, 0
      %p105 = por %p103, %p104
      %s107 = sadd.s32 %s106, 1
      %p110 = scmp.eq.s32.totalorder %s14, 1
      %p111 = scmp.ne.s32.totalorder %s106, %s108
      %p112 = scmp.eq.s32.totalorder %s14, 0
      %p113 = por %p111, %p112
      %p114 = scmp.ne.s32.totalorder %s106, %s108
      %p115 = scmp.eq.s32.totalorder %s19, 1
      %p116 = por %p114, %p115
      %p117 = scmp.ne.s32.totalorder %s108, %s109
      %p118 = scmp.eq.s32.totalorder %s19, 0
      %p119 = por %p117, %p118
      %p120 = scmp.ne.s32.totalorder %s108, %s109
      %p121 = scmp.eq.s32.totalorder %s20, 1
      %p122 = por %p120, %p121
      %p124 = scmp.ne.s32.totalorder %s109, %s123
      %p125 = scmp.eq.s32.totalorder %s20, 0
      %p126 = por %p124, %p125
      %s128 = sadd.s32 %s127, 1
      %p131 = scmp.eq.s32.totalorder %s14, 1
      %p132 = scmp.ne.s32.totalorder %s127, %s129
      %p133 = scmp.eq.s32.totalorder %s14, 0
      %p134 = por %p132, %p133
      %p135 = scmp.ne.s32.totalorder %s127, %s129
      %p136 = scmp.eq.s32.totalorder %s19, 1
      %p137 = por %p135, %p136
      %p138 = scmp.ne.s32.totalorder %s129, %s130
      %p139 = scmp.eq.s32.totalorder %s19, 0
      %p140 = por %p138, %p139
      %p141 = scmp.ne.s32.totalorder %s129, %s130
      %p142 = scmp.eq.s32.totalorder %s20, 1
      %p143 = por %p141, %p142
      %p145 = scmp.ne.s32.totalorder %s130, %s144
      %p146 = scmp.eq.s32.totalorder %s20, 0
      %p147 = por %p145, %p146
      %s148 = smul.u32 %s21, %s22
      %s149 = smul.u32 %s33, %s29
      %s150 = ssub.s32 %s148, %s149
      %p151 = scmp.eq.s32.totalorder %s150, 0
      %s153 = sadd.s32 %s152, 1
      %s154 = scalar_select %p151, %s152, %s153
      %p157 = pneg %p151
      %p158 = scmp.eq.s32.totalorder %s14, 1
      %p159 = por %p157, %p158
      %p160 = scmp.ne.s32.totalorder %s152, %s155
      %p161 = scmp.eq.s32.totalorder %s14, 0
      %p162 = por %p160, %p161
      %p163 = scmp.ne.s32.totalorder %s152, %s155
      %p164 = scmp.eq.s32.totalorder %s19, 1
      %p165 = por %p163, %p164
      %p166 = scmp.ne.s32.totalorder %s155, %s156
      %p167 = scmp.eq.s32.totalorder %s19, 0
      %p168 = por %p166, %p167
      %p169 = scmp.ne.s32.totalorder %s155, %s156
      %p170 = scmp.eq.s32.totalorder %s20, 1
      %p171 = por %p169, %p170
      %p173 = scmp.ne.s32.totalorder %s156, %s172
      %p174 = scmp.eq.s32.totalorder %s20, 0
      %p175 = por %p173, %p174
      %p176 = scmp.le.s32.totalorder 1, %s14
      %p177 = scmp.lt.s32.totalorder %s14, 3
      %p178 = pnand %p176, %p177
      %p179 = pneg %p178
      // Predicated region
      $region9: #{tpu_custom_call.1} parent=5 // pred_check
        _
      $region10: #{tpu_custom_call.1} parent=5 // pred_check_branch
        %181 = sbr.rel (%p178) target = $region12
      $region11: #{tpu_custom_call.1} parent=5 // pred_region
        %s182 = ssub.s32 %s14, 1
        // Predicated region
        $region13: #{tpu_custom_call.1} parent=11 // pred_check
          %p183 = pneg %p77
        $region14: #{tpu_custom_call.1} parent=11 // pred_check_branch
          %185 = sbr.rel (%p183) target = $region16
        $region15: #{tpu_custom_call.1} parent=11 // pred_region
          _
        $region16: #{tpu_custom_call.1} parent=11 // pred_fallthru
          _
        // Predicated region
        $region17: #{tpu_custom_call.1} parent=11 // pred_check
          %p186 = pneg %p98
        $region18: #{tpu_custom_call.1} parent=11 // pred_check_branch
          %188 = sbr.rel (%p186) target = $region20
        $region19: #{tpu_custom_call.1} parent=11 // pred_region
          _
        $region20: #{tpu_custom_call.1} parent=11 // pred_fallthru
          _
        // Predicated region
        $region21: #{tpu_custom_call.1} parent=11 // pred_check
          %p189 = pneg %p119
        $region22: #{tpu_custom_call.1} parent=11 // pred_check_branch
          %191 = sbr.rel (%p189) target = $region24
        $region23: #{tpu_custom_call.1} parent=11 // pred_region
          _
        $region24: #{tpu_custom_call.1} parent=11 // pred_fallthru
          _
        // Predicated region
        $region25: #{tpu_custom_call.1} parent=11 // pred_check
          %p192 = pneg %p140
        $region26: #{tpu_custom_call.1} parent=11 // pred_check_branch
          %194 = sbr.rel (%p192) target = $region28
        $region27: #{tpu_custom_call.1} parent=11 // pred_region
          _
        $region28: #{tpu_custom_call.1} parent=11 // pred_fallthru
          _
      $region12: #{tpu_custom_call.1} parent=5 // pred_fallthru
        _
      %p195 = scmp.lt.s32.totalorder %s14, 2
      // Predicated region
      $region29: #{tpu_custom_call.1} parent=5 // pred_check
        %p196 = pneg %p195
      $region30: #{tpu_custom_call.1} parent=5 // pred_check_branch
        %198 = sbr.rel (%p196) target = $region32
      $region31: #{tpu_custom_call.1} parent=5 // pred_region
        // Predicated region
        $region33: #{tpu_custom_call.1} parent=31 // pred_check
          %p199 = pneg %p50
        $region34: #{tpu_custom_call.1} parent=31 // pred_check_branch
          %201 = sbr.rel (%p199) target = $region36
        $region35: #{tpu_custom_call.1} parent=31 // pred_region
          %s202 = ssub.s32 1, %s21
          %s203 = smul.u32 %s202, %s22
          %s204 = smul.u32 2, %s203
          %p205 = scmp.lt.s32.totalorder %s204, 1
          %s206 = scalar_select %p205, %s204, 1
          %s207 = smul.addr %s206, 2
          %s208 = smul.addr %s207, 4
          %s209 = scalar_lea.vmem %s0, %s208
          %s210 = ssub.s32 1, %s21
          %s211 = smul.u32 %s210, %s22
          %s212 = smul.u32 2, %s211
        $region36: #{tpu_custom_call.1} parent=31 // pred_fallthru
          _
      $region32: #{tpu_custom_call.1} parent=5 // pred_fallthru
        _
      %p213 = scmp.le.s32.totalorder 1, %s14
      %p214 = scmp.lt.s32.totalorder %s14, 3
      %p215 = pnand %p213, %p214
      %p216 = pneg %p215
      // Predicated region
      $region37: #{tpu_custom_call.1} parent=5 // pred_check
        _
      $region38: #{tpu_custom_call.1} parent=5 // pred_check_branch
        %218 = sbr.rel (%p215) target = $region40
      $region39: #{tpu_custom_call.1} parent=5 // pred_region
        %s219 = ssub.s32 %s14, 1
        %s220 = ssub.s32 1, %s23
        %s221 = smul.u32 %s220, %s24
        %s222 = smul.u32 2, %s221
        %p223 = scmp.lt.s32.totalorder %s222, 1
        %s224 = scalar_select %p223, %s222, 1
        %s225 = smul.addr %s224, 2
        %s226 = smul.addr %s225, 4
        %s227 = scalar_lea.vmem %s0, %s226
        %p228 = pneg %p56
        %p229 = pneg %p53
        %p230 = pneg %p77
        %p231 = pneg %p74
        %p232 = pneg %p98
        %p233 = pneg %p95
        %p234 = pneg %p119
        %p235 = pneg %p116
        %p236 = pneg %p140
        %p237 = pneg %p137
        %p238 = pneg %p168
        %p239 = pneg %p165
        %s240 = sand.u32 %s155, 1
        %s241 = scalar_lea.sflag [#allocation6], %s240
        %s242 = sand.u32 %s155, 1
        %s243 = smul.addr %s242, 2
        %s244 = scalar_lea.vmem [#allocation5], %s243
        %s245 = ssub.s32 1, %s23
        %s246 = smul.u32 %s245, %s24
        %s247 = smul.u32 2, %s246
        %p248 = scmp.lt.s32.totalorder %s247, 1
        %s249 = scalar_select %p248, %s247, 1
        %s250 = smul.addr %s249, 2
        %s251 = smul.addr %s250, 4
        %s252 = scalar_lea.vmem %s0, %s251
        %s253 = ssub.s32 1, %s23
        %s254 = smul.u32 %s253, %s24
        %s255 = smul.u32 2, %s254
        %s256 = smul.u32 %s23, %s24
        %p257 = scmp.eq.s32.totalorder %s23, 0
        %p258 = scmp.eq.s32.totalorder %s24, 0
        %p259 = pnand %p257, %p258
        %p260 = pneg %p259
        // Predicated region
        $region41: #{tpu_custom_call.1} parent=39 // pred_check
          _
        $region42: #{tpu_custom_call.1} parent=39 // pred_check_branch
          %262 = sbr.rel (%p259) target = $region44
        $region43: #{tpu_custom_call.1} parent=39 // pred_region
          %vm263 = vcmask 7168
          %264 = vst.msk [vmem:[#allocation2] sm:$0xff] %vm263, 0.0
          %265 = vst.msk [vmem:[#allocation2 + $0x8] sm:$0xff] %vm263, 0.0
          %266 = vst.msk [vmem:[#allocation2 + $0x10] sm:$0xff] %vm263, 0.0
          %267 = vst.msk [vmem:[#allocation2 + $0x18] sm:$0xff] %vm263, 0.0
          %268 = vst.msk [vmem:[#allocation3] sm:$0xff] %vm263, 0.0
          %269 = vst.msk [vmem:[#allocation3 + $0x8] sm:$0xff] %vm263, 0.0
          %270 = vst.msk [vmem:[#allocation3 + $0x10] sm:$0xff] %vm263, 0.0
          %271 = vst.msk [vmem:[#allocation3 + $0x18] sm:$0xff] %vm263, 0.0
        $region44: #{tpu_custom_call.1} parent=39 // pred_fallthru
          _
        // Predicated region
        $region45: #{tpu_custom_call.1} parent=39 // pred_check
          %p272 = pneg %p257
        $region46: #{tpu_custom_call.1} parent=39 // pred_check_branch
          %274 = sbr.rel (%p272) target = $region48
        $region47: #{tpu_custom_call.1} parent=39 // pred_region
          %v275 = vld [vmem:[%s252] sm:$0xff]
          %v276 = vld [vmem:[%s252 + $0x8] sm:$0xff]
          %v277 = vld [vmem:[%s1] sm:$0xff]
          %v278 = vld [vmem:[%s1 + $0x8] sm:$0xff]
          %v279 = vld [vmem:[%s1 + $0x10] sm:$0xff]
          %v280 = vld [vmem:[%s1 + $0x18] sm:$0xff]
          %282 = vset.pattern.permute.xlu0 0
          %283 = vperm.xlu0 %282, %v277
          %v284 = vpop.permute.xlu0 %283
          %287 = vset.pattern.permute.xlu0 0
          %288 = vperm.xlu0 %287, %v278
          %v289 = vpop.permute.xlu0 %288
          %292 = vset.pattern.permute.xlu0 0
          %293 = vperm.xlu0 %292, %v279
          %v294 = vpop.permute.xlu0 %293
          %297 = vset.pattern.permute.xlu0 0
          %298 = vperm.xlu0 %297, %v280
          %v299 = vpop.permute.xlu0 %298
          %v303 = vperm.slane %v275, 0
          %v304 = vperm.slane %v275, 4
          %v305 = vperm.slane %v276, 0
          %v306 = vperm.slane %v276, 4
          %v311 = vperm.slane %v303, 0
          %v312 = vperm.slane %v304, 0
          %v313 = vperm.slane %v305, 0
          %v314 = vperm.slane %v306, 0
          %v315 = vmul.f32 %v284, %v311
          %v316 = vmul.f32 %v284, %v312
          %v317 = vmul.f32 %v289, %v311
          %v318 = vmul.f32 %v289, %v312
          %v319 = vmul.f32 %v294, %v311
          %v320 = vmul.f32 %v294, %v312
          %v321 = vmul.f32 %v299, %v311
          %v322 = vmul.f32 %v299, %v312
          %v323 = vmul.f32 %v284, %v313
          %v324 = vmul.f32 %v284, %v314
          %v325 = vmul.f32 %v289, %v313
          %v326 = vmul.f32 %v289, %v314
          %v327 = vmul.f32 %v294, %v313
          %v328 = vmul.f32 %v294, %v314
          %v329 = vmul.f32 %v299, %v313
          %v330 = vmul.f32 %v299, %v314
          %331 = vset.pattern.permute.xlu0 1
          %332 = vperm.xlu0 %331, %v277
          %v333 = vpop.permute.xlu0 %332
          %335 = vset.pattern.permute.xlu0 1
          %336 = vperm.xlu0 %335, %v278
          %v337 = vpop.permute.xlu0 %336
          %339 = vset.pattern.permute.xlu0 1
          %340 = vperm.xlu0 %339, %v279
          %v341 = vpop.permute.xlu0 %340
          %343 = vset.pattern.permute.xlu0 1
          %344 = vperm.xlu0 %343, %v280
          %v345 = vpop.permute.xlu0 %344
          %v347 = vperm.slane %v275, 1
          %v348 = vperm.slane %v275, 5
          %v349 = vperm.slane %v276, 1
          %v350 = vperm.slane %v276, 5
          %v355 = vperm.slane %v347, 1
          %v356 = vperm.slane %v348, 1
          %v357 = vperm.slane %v349, 1
          %v358 = vperm.slane %v350, 1
          %v359 = vmul.f32 %v333, %v355
          %v360 = vmul.f32 %v333, %v356
          %v361 = vmul.f32 %v337, %v355
          %v362 = vmul.f32 %v337, %v356
          %v363 = vmul.f32 %v341, %v355
          %v364 = vmul.f32 %v341, %v356
          %v365 = vmul.f32 %v345, %v355
          %v366 = vmul.f32 %v345, %v356
          %v367 = vmul.f32 %v333, %v357
          %v368 = vmul.f32 %v333, %v358
          %v369 = vmul.f32 %v337, %v357
          %v370 = vmul.f32 %v337, %v358
          %v371 = vmul.f32 %v341, %v357
          %v372 = vmul.f32 %v341, %v358
          %v373 = vmul.f32 %v345, %v357
          %v374 = vmul.f32 %v345, %v358
          %v375 = vadd.f32 %v315, %v359
          %v376 = vadd.f32 %v316, %v360
          %v377 = vadd.f32 %v317, %v361
          %v378 = vadd.f32 %v318, %v362
          %v379 = vadd.f32 %v319, %v363
          %v380 = vadd.f32 %v320, %v364
          %v381 = vadd.f32 %v321, %v365
          %v382 = vadd.f32 %v322, %v366
          %v383 = vadd.f32 %v323, %v367
          %v384 = vadd.f32 %v324, %v368
          %v385 = vadd.f32 %v325, %v369
          %v386 = vadd.f32 %v326, %v370
          %v387 = vadd.f32 %v327, %v371
          %v388 = vadd.f32 %v328, %v372
          %v389 = vadd.f32 %v329, %v373
          %v390 = vadd.f32 %v330, %v374
          %391 = vset.pattern.permute.xlu0 2
          %392 = vperm.xlu0 %391, %v277
          %v393 = vpop.permute.xlu0 %392
          %395 = vset.pattern.permute.xlu0 2
          %396 = vperm.xlu0 %395, %v278
          %v397 = vpop.permute.xlu0 %396
          %399 = vset.pattern.permute.xlu0 2
          %400 = vperm.xlu0 %399, %v279
          %v401 = vpop.permute.xlu0 %400
          %403 = vset.pattern.permute.xlu0 2
          %404 = vperm.xlu0 %403, %v280
          %v405 = vpop.permute.xlu0 %404
          %v407 = vperm.slane %v275, 2
          %v408 = vperm.slane %v275, 6
          %v409 = vperm.slane %v276, 2
          %v410 = vperm.slane %v276, 6
          %v415 = vperm.slane %v407, 2
          %v416 = vperm.slane %v408, 2
          %v417 = vperm.slane %v409, 2
          %v418 = vperm.slane %v410, 2
          %v419 = vmul.f32 %v393, %v415
          %v420 = vmul.f32 %v393, %v416
          %v421 = vmul.f32 %v397, %v415
          %v422 = vmul.f32 %v397, %v416
          %v423 = vmul.f32 %v401, %v415
          %v424 = vmul.f32 %v401, %v416
          %v425 = vmul.f32 %v405, %v415
          %v426 = vmul.f32 %v405, %v416
          %v427 = vmul.f32 %v393, %v417
          %v428 = vmul.f32 %v393, %v418
          %v429 = vmul.f32 %v397, %v417
          %v430 = vmul.f32 %v397, %v418
          %v431 = vmul.f32 %v401, %v417
          %v432 = vmul.f32 %v401, %v418
          %v433 = vmul.f32 %v405, %v417
          %v434 = vmul.f32 %v405, %v418
          %v435 = vadd.f32 %v375, %v419
          %v436 = vadd.f32 %v376, %v420
          %v437 = vadd.f32 %v377, %v421
          %v438 = vadd.f32 %v378, %v422
          %v439 = vadd.f32 %v379, %v423
          %v440 = vadd.f32 %v380, %v424
          %v441 = vadd.f32 %v381, %v425
          %v442 = vadd.f32 %v382, %v426
          %v443 = vadd.f32 %v383, %v427
          %v444 = vadd.f32 %v384, %v428
          %v445 = vadd.f32 %v385, %v429
          %v446 = vadd.f32 %v386, %v430
          %v447 = vadd.f32 %v387, %v431
          %v448 = vadd.f32 %v388, %v432
          %v449 = vadd.f32 %v389, %v433
          %v450 = vadd.f32 %v390, %v434
          %451 = vset.pattern.permute.xlu0 3
          %452 = vperm.xlu0 %451, %v277
          %v453 = vpop.permute.xlu0 %452
          %455 = vset.pattern.permute.xlu0 3
          %456 = vperm.xlu0 %455, %v278
          %v457 = vpop.permute.xlu0 %456
          %459 = vset.pattern.permute.xlu0 3
          %460 = vperm.xlu0 %459, %v279
          %v461 = vpop.permute.xlu0 %460
          %463 = vset.pattern.permute.xlu0 3
          %464 = vperm.xlu0 %463, %v280
          %v465 = vpop.permute.xlu0 %464
          %v467 = vperm.slane %v275, 3
          %v468 = vperm.slane %v275, 7
          %v469 = vperm.slane %v276, 3
          %v470 = vperm.slane %v276, 7
          %v475 = vperm.slane %v467, 3
          %v476 = vperm.slane %v468, 3
          %v477 = vperm.slane %v469, 3
          %v478 = vperm.slane %v470, 3
          %v479 = vmul.f32 %v453, %v475
          %v480 = vmul.f32 %v453, %v476
          %v481 = vmul.f32 %v457, %v475
          %v482 = vmul.f32 %v457, %v476
          %v483 = vmul.f32 %v461, %v475
          %v484 = vmul.f32 %v461, %v476
          %v485 = vmul.f32 %v465, %v475
          %v486 = vmul.f32 %v465, %v476
          %v487 = vmul.f32 %v453, %v477
          %v488 = vmul.f32 %v453, %v478
          %v489 = vmul.f32 %v457, %v477
          %v490 = vmul.f32 %v457, %v478
          %v491 = vmul.f32 %v461, %v477
          %v492 = vmul.f32 %v461, %v478
          %v493 = vmul.f32 %v465, %v477
          %v494 = vmul.f32 %v465, %v478
          %v495 = vadd.f32 %v435, %v479
          %v496 = vadd.f32 %v436, %v480
          %v497 = vadd.f32 %v437, %v481
          %v498 = vadd.f32 %v438, %v482
          %v499 = vadd.f32 %v439, %v483
          %v500 = vadd.f32 %v440, %v484
          %v501 = vadd.f32 %v441, %v485
          %v502 = vadd.f32 %v442, %v486
          %v503 = vadd.f32 %v443, %v487
          %v504 = vadd.f32 %v444, %v488
          %v505 = vadd.f32 %v445, %v489
          %v506 = vadd.f32 %v446, %v490
          %v507 = vadd.f32 %v447, %v491
          %v508 = vadd.f32 %v448, %v492
          %v509 = vadd.f32 %v449, %v493
          %v510 = vadd.f32 %v450, %v494
          %s511 = smul.u32 %s24, 2
          %s512 = smul.u32 %s511, 8
          %s513 = smul.addr %s512, 8
          %s514 = scalar_lea.vmem [#allocation4], %s513
          %515 = vst [vmem:[%s514] sm:$0xff] %v495
          %516 = vst [vmem:[%s514 + $0x8] sm:$0xff] %v496
          %517 = vst [vmem:[%s514 + $0x10] sm:$0xff] %v497
          %518 = vst [vmem:[%s514 + $0x18] sm:$0xff] %v498
          %519 = vst [vmem:[%s514 + $0x20] sm:$0xff] %v499
          %520 = vst [vmem:[%s514 + $0x28] sm:$0xff] %v500
          %521 = vst [vmem:[%s514 + $0x30] sm:$0xff] %v501
          %522 = vst [vmem:[%s514 + $0x38] sm:$0xff] %v502
          %523 = vst [vmem:[%s514 + $0x40] sm:$0xff] %v503
          %524 = vst [vmem:[%s514 + $0x48] sm:$0xff] %v504
          %525 = vst [vmem:[%s514 + $0x50] sm:$0xff] %v505
          %526 = vst [vmem:[%s514 + $0x58] sm:$0xff] %v506
          %527 = vst [vmem:[%s514 + $0x60] sm:$0xff] %v507
          %528 = vst [vmem:[%s514 + $0x68] sm:$0xff] %v508
          %529 = vst [vmem:[%s514 + $0x70] sm:$0xff] %v509
          %530 = vst [vmem:[%s514 + $0x78] sm:$0xff] %v510
          %v531 = vld [vmem:[#allocation2] sm:$0xff]
          %v532 = vld [vmem:[#allocation2 + $0x8] sm:$0xff]
          %v533 = vld [vmem:[#allocation2 + $0x10] sm:$0xff]
          %v534 = vld [vmem:[#allocation2 + $0x18] sm:$0xff]
          %v535 = vadd.f32 %v495, %v496
          %536 = vadd.xlane.f32.xlu0 %v535
          %v537 = vpop.xlane.xlu0 %536
          %v538 = vadd.f32 %v497, %v498
          %539 = vadd.xlane.f32.xlu0 %v538
          %v540 = vpop.xlane.xlu0 %539
          %v541 = vadd.f32 %v499, %v500
          %542 = vadd.xlane.f32.xlu0 %v541
          %v543 = vpop.xlane.xlu0 %542
          %v544 = vadd.f32 %v501, %v502
          %545 = vadd.xlane.f32.xlu0 %v544
          %v546 = vpop.xlane.xlu0 %545
          %v547 = vadd.f32 %v503, %v504
          %548 = vadd.xlane.f32.xlu0 %v547
          %v549 = vpop.xlane.xlu0 %548
          %v550 = vadd.f32 %v505, %v506
          %551 = vadd.xlane.f32.xlu0 %v550
          %v552 = vpop.xlane.xlu0 %551
          %v553 = vadd.f32 %v507, %v508
          %554 = vadd.xlane.f32.xlu0 %v553
          %v555 = vpop.xlane.xlu0 %554
          %v556 = vadd.f32 %v509, %v510
          %557 = vadd.xlane.f32.xlu0 %v556
          %v558 = vpop.xlane.xlu0 %557
          %v559 = vadd.f32 %v537, %v549
          %v560 = vadd.f32 %v540, %v552
          %v561 = vadd.f32 %v543, %v555
          %v562 = vadd.f32 %v546, %v558
          %v563 = vadd.f32 %v531, %v559
          %v564 = vadd.f32 %v532, %v560
          %v565 = vadd.f32 %v533, %v561
          %v566 = vadd.f32 %v534, %v562
          %vm567 = vcmask 7168
          %568 = vst.msk [vmem:[#allocation2] sm:$0xff] %vm567, %v563
          %569 = vst.msk [vmem:[#allocation2 + $0x8] sm:$0xff] %vm567, %v564
          %570 = vst.msk [vmem:[#allocation2 + $0x10] sm:$0xff] %vm567, %v565
          %571 = vst.msk [vmem:[#allocation2 + $0x18] sm:$0xff] %vm567, %v566
          %v572 = vld [vmem:[#allocation3] sm:$0xff]
          %v573 = vld [vmem:[#allocation3 + $0x8] sm:$0xff]
          %v574 = vld [vmem:[#allocation3 + $0x10] sm:$0xff]
          %v575 = vld [vmem:[#allocation3 + $0x18] sm:$0xff]
          %v576 = vmul.f32 %v495, %v495
          %v577 = vmul.f32 %v496, %v496
          %v578 = vmul.f32 %v497, %v497
          %v579 = vmul.f32 %v498, %v498
          %v580 = vmul.f32 %v499, %v499
          %v581 = vmul.f32 %v500, %v500
          %v582 = vmul.f32 %v501, %v501
          %v583 = vmul.f32 %v502, %v502
          %v584 = vmul.f32 %v503, %v503
          %v585 = vmul.f32 %v504, %v504
          %v586 = vmul.f32 %v505, %v505
          %v587 = vmul.f32 %v506, %v506
          %v588 = vmul.f32 %v507, %v507
          %v589 = vmul.f32 %v508, %v508
          %v590 = vmul.f32 %v509, %v509
          %v591 = vmul.f32 %v510, %v510
          %v592 = vadd.f32 %v576, %v577
          %593 = vadd.xlane.f32.xlu0 %v592
          %v594 = vpop.xlane.xlu0 %593
          %v595 = vadd.f32 %v578, %v579
          %596 = vadd.xlane.f32.xlu0 %v595
          %v597 = vpop.xlane.xlu0 %596
          %v598 = vadd.f32 %v580, %v581
          %599 = vadd.xlane.f32.xlu0 %v598
          %v600 = vpop.xlane.xlu0 %599
          %v601 = vadd.f32 %v582, %v583
          %602 = vadd.xlane.f32.xlu0 %v601
          %v603 = vpop.xlane.xlu0 %602
          %v604 = vadd.f32 %v584, %v585
          %605 = vadd.xlane.f32.xlu0 %v604
          %v606 = vpop.xlane.xlu0 %605
          %v607 = vadd.f32 %v586, %v587
          %608 = vadd.xlane.f32.xlu0 %v607
          %v609 = vpop.xlane.xlu0 %608
          %v610 = vadd.f32 %v588, %v589
          %611 = vadd.xlane.f32.xlu0 %v610
          %v612 = vpop.xlane.xlu0 %611
          %v613 = vadd.f32 %v590, %v591
          %614 = vadd.xlane.f32.xlu0 %v613
          %v615 = vpop.xlane.xlu0 %614
          %v616 = vadd.f32 %v594, %v606
          %v617 = vadd.f32 %v597, %v609
          %v618 = vadd.f32 %v600, %v612
          %v619 = vadd.f32 %v603, %v615
          %v620 = vadd.f32 %v572, %v616
          %v621 = vadd.f32 %v573, %v617
          %v622 = vadd.f32 %v574, %v618
          %v623 = vadd.f32 %v575, %v619
          %624 = vst.msk [vmem:[#allocation3] sm:$0xff] %vm567, %v620
          %625 = vst.msk [vmem:[#allocation3 + $0x8] sm:$0xff] %vm567, %v621
          %626 = vst.msk [vmem:[#allocation3 + $0x10] sm:$0xff] %vm567, %v622
          %627 = vst.msk [vmem:[#allocation3 + $0x18] sm:$0xff] %vm567, %v623
        $region48: #{tpu_custom_call.1} parent=39 // pred_fallthru
          _
        %p628 = scmp.eq.s32.totalorder %s23, 1
        // Predicated region
        $region49: #{tpu_custom_call.1} parent=39 // pred_check
          %p629 = pneg %p628
        $region50: #{tpu_custom_call.1} parent=39 // pred_check_branch
          %631 = sbr.rel (%p629) target = $region52
        $region51: #{tpu_custom_call.1} parent=39 // pred_region
          %s632 = smul.u32 %s24, 2
          %s633 = smul.u32 %s632, 8
          %s634 = smul.addr %s633, 8
          %s635 = scalar_lea.vmem [#allocation4], %s634
          %v636 = vld [vmem:[%s635] sm:$0xff]
          %v637 = vld [vmem:[%s635 + $0x8] sm:$0xff]
          %v638 = vld [vmem:[%s635 + $0x10] sm:$0xff]
          %v639 = vld [vmem:[%s635 + $0x18] sm:$0xff]
          %v640 = vld [vmem:[%s635 + $0x20] sm:$0xff]
          %v641 = vld [vmem:[%s635 + $0x28] sm:$0xff]
          %v642 = vld [vmem:[%s635 + $0x30] sm:$0xff]
          %v643 = vld [vmem:[%s635 + $0x38] sm:$0xff]
          %v644 = vld [vmem:[%s635 + $0x40] sm:$0xff]
          %v645 = vld [vmem:[%s635 + $0x48] sm:$0xff]
          %v646 = vld [vmem:[%s635 + $0x50] sm:$0xff]
          %v647 = vld [vmem:[%s635 + $0x58] sm:$0xff]
          %v648 = vld [vmem:[%s635 + $0x60] sm:$0xff]
          %v649 = vld [vmem:[%s635 + $0x68] sm:$0xff]
          %v650 = vld [vmem:[%s635 + $0x70] sm:$0xff]
          %v651 = vld [vmem:[%s635 + $0x78] sm:$0xff]
          %v652 = vld [vmem:[%s2] sm:$0xff]
          %v653 = vld [vmem:[%s2 + $0x8] sm:$0xff]
          %v654 = vld [vmem:[%s2 + $0x10] sm:$0xff]
          %v655 = vld [vmem:[%s2 + $0x18] sm:$0xff]
          %v656 = vld [vmem:[#allocation2] sm:$0xff]
          %v657 = vld [vmem:[#allocation2 + $0x8] sm:$0xff]
          %v658 = vld [vmem:[#allocation2 + $0x10] sm:$0xff]
          %v659 = vld [vmem:[#allocation2 + $0x18] sm:$0xff]
          %v660 = vmul.f32 %v656, 0.001953125
          %v661 = vmul.f32 %v657, 0.001953125
          %v662 = vmul.f32 %v658, 0.001953125
          %v663 = vmul.f32 %v659, 0.001953125
          %v664 = vld [vmem:[#allocation3] sm:$0xff]
          %v665 = vld [vmem:[#allocation3 + $0x8] sm:$0xff]
          %v666 = vld [vmem:[#allocation3 + $0x10] sm:$0xff]
          %v667 = vld [vmem:[#allocation3 + $0x18] sm:$0xff]
          %v668 = vmul.f32 %v664, 0.001953125
          %v669 = vmul.f32 %v665, 0.001953125
          %v670 = vmul.f32 %v666, 0.001953125
          %v671 = vmul.f32 %v667, 0.001953125
          %v672 = vmul.f32 %v660, %v660
          %v673 = vmul.f32 %v661, %v661
          %v674 = vmul.f32 %v662, %v662
          %v675 = vmul.f32 %v663, %v663
          %v676 = vsub.f32 %v668, %v672
          %v677 = vsub.f32 %v669, %v673
          %v678 = vsub.f32 %v670, %v674
          %v679 = vsub.f32 %v671, %v675
          %v680 = vmax.f32 %v676, 0.0
          %v681 = vmax.f32 %v677, 0.0
          %v682 = vmax.f32 %v678, 0.0
          %v683 = vmax.f32 %v679, 0.0
          %v684 = vadd.f32 %v680, 1e-05
          %v685 = vadd.f32 %v681, 1e-05
          %v686 = vadd.f32 %v682, 1e-05
          %v687 = vadd.f32 %v683, 1e-05
          %v688 = vrsqrt.pop %v684
          %v689 = vmul.f32 %v688, %v684
          %v690 = vmul.f32 %v689, %v688
          %v691 = vmul.f32 0.5, %v690
          %v692 = vsub.f32 1.5, %v691
          %v693 = vmul.f32 %v688, %v692
          %vm694 = vweird.f32 %v684
          %vm695 = vweird.f32 %v688
          %vm696 = vmor %vm694, %vm695
          %v697 = vsel %vm696, %v688, %v693
          %v698 = vrsqrt.pop %v685
          %v699 = vmul.f32 %v698, %v685
          %v700 = vmul.f32 %v699, %v698
          %v701 = vmul.f32 0.5, %v700
          %v702 = vsub.f32 1.5, %v701
          %v703 = vmul.f32 %v698, %v702
          %vm704 = vweird.f32 %v685
          %vm705 = vweird.f32 %v698
          %vm706 = vmor %vm704, %vm705
          %v707 = vsel %vm706, %v698, %v703
          %v708 = vrsqrt.pop %v686
          %v709 = vmul.f32 %v708, %v686
          %v710 = vmul.f32 %v709, %v708
          %v711 = vmul.f32 0.5, %v710
          %v712 = vsub.f32 1.5, %v711
          %v713 = vmul.f32 %v708, %v712
          %vm714 = vweird.f32 %v686
          %vm715 = vweird.f32 %v708
          %vm716 = vmor %vm714, %vm715
          %v717 = vsel %vm716, %v708, %v713
          %v718 = vrsqrt.pop %v687
          %v719 = vmul.f32 %v718, %v687
          %v720 = vmul.f32 %v719, %v718
          %v721 = vmul.f32 0.5, %v720
          %v722 = vsub.f32 1.5, %v721
          %v723 = vmul.f32 %v718, %v722
          %vm724 = vweird.f32 %v687
          %vm725 = vweird.f32 %v718
          %vm726 = vmor %vm724, %vm725
          %v727 = vsel %vm726, %v718, %v723
          %v728 = vmul.f32 %v697, %v652
          %v729 = vmul.f32 %v707, %v653
          %v730 = vmul.f32 %v717, %v654
          %v731 = vmul.f32 %v727, %v655
          %v732 = vmul.f32 %v660, %v728
          %v733 = vmul.f32 %v661, %v729
          %v734 = vmul.f32 %v662, %v730
          %v735 = vmul.f32 %v663, %v731
          %740 = vrot.lane.b32.xlu0 %v732, 1
          %v741 = vpop.permute.xlu0 %740
          %742 = vrot.lane.b32.xlu0 %v733, 1
          %v743 = vpop.permute.xlu0 %742
          %744 = vrot.lane.b32.xlu0 %v734, 1
          %v745 = vpop.permute.xlu0 %744
          %746 = vrot.lane.b32.xlu0 %v735, 1
          %v747 = vpop.permute.xlu0 %746
          %v752 = vsub.f32 %v652, %v741
          %v753 = vsub.f32 %v653, %v743
          %v754 = vsub.f32 %v654, %v745
          %v755 = vsub.f32 %v655, %v747
          %757 = vset.pattern.permute.xlu0 0
          %758 = vperm.xlu0 %757, %v728
          %v759 = vpop.permute.xlu0 %758
          %762 = vset.pattern.permute.xlu0 0
          %763 = vperm.xlu0 %762, %v729
          %v764 = vpop.permute.xlu0 %763
          %767 = vset.pattern.permute.xlu0 0
          %768 = vperm.xlu0 %767, %v730
          %v769 = vpop.permute.xlu0 %768
          %772 = vset.pattern.permute.xlu0 0
          %773 = vperm.xlu0 %772, %v731
          %v774 = vpop.permute.xlu0 %773
          %v776 = vmul.f32 %v636, %v759
          %v777 = vmul.f32 %v637, %v759
          %v778 = vmul.f32 %v638, %v764
          %v779 = vmul.f32 %v639, %v764
          %v780 = vmul.f32 %v640, %v769
          %v781 = vmul.f32 %v641, %v769
          %v782 = vmul.f32 %v642, %v774
          %v783 = vmul.f32 %v643, %v774
          %v784 = vmul.f32 %v644, %v759
          %v785 = vmul.f32 %v645, %v759
          %v786 = vmul.f32 %v646, %v764
          %v787 = vmul.f32 %v647, %v764
          %v788 = vmul.f32 %v648, %v769
          %v789 = vmul.f32 %v649, %v769
          %v790 = vmul.f32 %v650, %v774
          %v791 = vmul.f32 %v651, %v774
          %793 = vset.pattern.permute.xlu0 1
          %794 = vperm.xlu0 %793, %v752
          %v795 = vpop.permute.xlu0 %794
          %798 = vset.pattern.permute.xlu0 1
          %799 = vperm.xlu0 %798, %v753
          %v800 = vpop.permute.xlu0 %799
          %803 = vset.pattern.permute.xlu0 1
          %804 = vperm.xlu0 %803, %v754
          %v805 = vpop.permute.xlu0 %804
          %808 = vset.pattern.permute.xlu0 1
          %809 = vperm.xlu0 %808, %v755
          %v810 = vpop.permute.xlu0 %809
          %v812 = vadd.f32 %v776, %v795
          %v813 = vadd.f32 %v777, %v795
          %v814 = vadd.f32 %v778, %v800
          %v815 = vadd.f32 %v779, %v800
          %v816 = vadd.f32 %v780, %v805
          %v817 = vadd.f32 %v781, %v805
          %v818 = vadd.f32 %v782, %v810
          %v819 = vadd.f32 %v783, %v810
          %v820 = vadd.f32 %v784, %v795
          %v821 = vadd.f32 %v785, %v795
          %v822 = vadd.f32 %v786, %v800
          %v823 = vadd.f32 %v787, %v800
          %v824 = vadd.f32 %v788, %v805
          %v825 = vadd.f32 %v789, %v805
          %v826 = vadd.f32 %v790, %v810
          %v827 = vadd.f32 %v791, %v810
          %v828 = vmax.f32 %v812, 0.0
          %v829 = vmax.f32 %v813, 0.0
          %v830 = vmax.f32 %v814, 0.0
          %v831 = vmax.f32 %v815, 0.0
          %v832 = vmax.f32 %v816, 0.0
          %v833 = vmax.f32 %v817, 0.0
          %v834 = vmax.f32 %v818, 0.0
          %v835 = vmax.f32 %v819, 0.0
          %v836 = vmax.f32 %v820, 0.0
          %v837 = vmax.f32 %v821, 0.0
          %v838 = vmax.f32 %v822, 0.0
          %v839 = vmax.f32 %v823, 0.0
          %v840 = vmax.f32 %v824, 0.0
          %v841 = vmax.f32 %v825, 0.0
          %v842 = vmax.f32 %v826, 0.0
          %v843 = vmax.f32 %v827, 0.0
          %v844 = vadd.f32 %v828, %v829
          %845 = vadd.xlane.f32.xlu0 %v844
          %v846 = vpop.xlane.xlu0 %845
          %v847 = vadd.f32 %v830, %v831
          %848 = vadd.xlane.f32.xlu0 %v847
          %v849 = vpop.xlane.xlu0 %848
          %v850 = vadd.f32 %v832, %v833
          %851 = vadd.xlane.f32.xlu0 %v850
          %v852 = vpop.xlane.xlu0 %851
          %v853 = vadd.f32 %v834, %v835
          %854 = vadd.xlane.f32.xlu0 %v853
          %v855 = vpop.xlane.xlu0 %854
          %v856 = vadd.f32 %v836, %v837
          %857 = vadd.xlane.f32.xlu0 %v856
          %v858 = vpop.xlane.xlu0 %857
          %v859 = vadd.f32 %v838, %v839
          %860 = vadd.xlane.f32.xlu0 %v859
          %v861 = vpop.xlane.xlu0 %860
          %v862 = vadd.f32 %v840, %v841
          %863 = vadd.xlane.f32.xlu0 %v862
          %v864 = vpop.xlane.xlu0 %863
          %v865 = vadd.f32 %v842, %v843
          %866 = vadd.xlane.f32.xlu0 %v865
          %v867 = vpop.xlane.xlu0 %866
          %v868 = vmul.f32 %v846, 0.00390625
          %v869 = vmul.f32 %v849, 0.00390625
          %v870 = vmul.f32 %v852, 0.00390625
          %v871 = vmul.f32 %v855, 0.00390625
          %v872 = vmul.f32 %v858, 0.00390625
          %v873 = vmul.f32 %v861, 0.00390625
          %v874 = vmul.f32 %v864, 0.00390625
          %v875 = vmul.f32 %v867, 0.00390625
          %v876 = vld [vmem:[%s3] sm:$0xff]
          %v877 = vld [vmem:[%s3 + $0x8] sm:$0xff]
          %v878 = vld [vmem:[%s3 + $0x10] sm:$0xff]
          %v879 = vld [vmem:[%s3 + $0x18] sm:$0xff]
          %v880 = vld [vmem:[%s4] sm:$0x1]
          %v882 = vperm.slane %v880, 0
          %v892 = vlaneseq
          %v893 = vand.u32 %v892, 127
          %v894 = vperm.slane %v868, %v893
          %v895 = vadd.s32 %v893, 4294967288
          %v896 = vperm.slane %v869, %v895
          %vm897 = vcmask 130112
          %v898 = vsel %vm897, %v896, %v894
          %v899 = vadd.s32 %v893, 4294967280
          %v900 = vperm.slane %v870, %v899
          %vm901 = vcmask 195712
          %v902 = vsel %vm901, %v900, %v898
          %v903 = vadd.s32 %v893, 4294967272
          %v904 = vperm.slane %v871, %v903
          %vm905 = vcmask 261312
          %v906 = vsel %vm905, %v904, %v902
          %v907 = vperm.slane %v872, %v893
          %v908 = vperm.slane %v873, %v895
          %v909 = vsel %vm897, %v908, %v907
          %v910 = vperm.slane %v874, %v899
          %v911 = vsel %vm901, %v910, %v909
          %v912 = vperm.slane %v875, %v903
          %v913 = vsel %vm905, %v912, %v911
          %vm914 = vcmask 1041409
          %v915 = vsel %vm914, %v913, %v906
          %vm916 = vcmask 261120
          %v917 = vsel %vm916, %v915, 0
          %919 = vmatpush.msra.mxu0 0.0
          %920 = vmatpush.msra.mxu0 0.0
          %921 = vmatpush.msra.mxu0 0.0
          %922 = vmatpush.msra.mxu0 0.0
          %923 = vmatpush.msra.mxu0 0.0
          %924 = vmatpush.msra.mxu0 0.0
          %925 = vmatpush.msra.mxu0 0.0
          %926 = vmatpush.msra.mxu0 0.0
          %927 = vmatpush.msra.mxu0 0.0
          %928 = vmatpush.msra.mxu0 0.0
          %929 = vmatpush.msra.mxu0 0.0
          %930 = vmatpush.msra.mxu0 0.0
          %931 = vmatpush.msra.mxu0 %v879
          %932 = vmatpush.msra.mxu0 %v878
          %933 = vmatpush.msra.mxu0 %v877
          %934 = vmatpush.msra.mxu0 %v876
          %935 = vmatmul.f32.gmra.mxu0 %v917
          %v936 = vpop.f32.mrf.mxu0
          %v937 = vadd.f32 %v882, %v936
          %938 = vdwg.mxu0
          %vm939 = vcmask 58368
          %v940 = vsel %vm939, %v937, -inf
          %941 = vmax.xlane.f32.xlu0 %v940
          %v942 = vpop.xlane.xlu0 %941
          %v943 = vsub.f32 %v937, %v942
          %v944 = vmul.f32 %v943, 1.442695
          %v945 = vpow.pop %v944
          %v946 = vsel %vm939, %v945, 0.0
          %947 = vadd.xlane.f32.xlu0 %v946
          %v948 = vpop.xlane.xlu0 %947
          %v949 = vrcp.pop %v948
          %v950 = vmul.f32 %v948, %v949
          %v951 = vsub.f32 1.0, %v950
          %v952 = vmul.f32 %v949, %v951
          %v953 = vadd.f32 %v949, %v952
          %vm954 = vweird.f32 %v948
          %vm955 = vweird.f32 %v949
          %vm956 = vmor %vm954, %vm955
          %v957 = vsel %vm956, %v949, %v953
          %v958 = vand.u32 2147483647, %v948
          %vm959 = vcmp.eq.f32.partialorder %v958, 8.507059e+37
          %v960 = vand.u32 %v948, 2147483648
          %v961 = vor.u32 1.1754944e-38, %v960
          %v962 = vsel %vm959, %v961, %v957
          %v963 = vmul.f32 %v945, %v962
          %964 = vst.msk [vmem:[%s244] sm:$0x3] %vm939, %v963
        $region52: #{tpu_custom_call.1} parent=39 // pred_fallthru
          _
        %s965 = sand.u32 %s155, 1
        %s966 = scalar_lea.sflag [#allocation6], %s965
        %s967 = sand.u32 %s155, 1
        %s968 = smul.addr %s967, 2
        %s969 = scalar_lea.vmem [#allocation5], %s968
        // Predicated region
        $region53: #{tpu_custom_call.1} parent=39 // pred_check
          %p970 = pneg %p165
        $region54: #{tpu_custom_call.1} parent=39 // pred_check_branch
          %972 = sbr.rel (%p970) target = $region56
        $region55: #{tpu_custom_call.1} parent=39 // pred_region
          %s973 = smul.u32 %s23, %s24
          %975 = vsyncadd %s966, 0
          %s976 = smul.addr %s973, 2
          %s977 = scalar_lea.hbm %s5, %s976
          %s979 = sshll.u32 %s969, 4
          %s980 = int_to_ptr.vmem [resolvable:$true] %s979
          %s981 = sshll.u32 %s977, 4
          %s982 = int_to_ptr.hbm [resolvable:$true] %s981
          %984 = dma.vmem_to_hbm [thread:$0]  %s980, 32, %s982, %s966
        $region56: #{tpu_custom_call.1} parent=39 // pred_fallthru
          _
      $region40: #{tpu_custom_call.1} parent=5 // pred_fallthru
        _
      %p985 = scmp.le.s32.totalorder 2, %s14
      // Predicated region
      $region57: #{tpu_custom_call.1} parent=5 // pred_check
        %p986 = pneg %p985
      $region58: #{tpu_custom_call.1} parent=5 // pred_check_branch
        %988 = sbr.rel (%p986) target = $region60
      $region59: #{tpu_custom_call.1} parent=5 // pred_region
        %s989 = ssub.s32 %s14, 2
        // Predicated region
        $region61: #{tpu_custom_call.1} parent=59 // pred_check
          %p990 = pneg %p171
        $region62: #{tpu_custom_call.1} parent=59 // pred_check_branch
          %992 = sbr.rel (%p990) target = $region64
        $region63: #{tpu_custom_call.1} parent=59 // pred_region
          %s993 = sand.u32 %s156, 1
          %s994 = scalar_lea.sflag [#allocation6], %s993
          %s995 = sand.u32 %s156, 1
          %s996 = smul.addr %s995, 2
          %s997 = scalar_lea.vmem [#allocation5], %s996
          %999 = dma.done %s994, 32
        $region64: #{tpu_custom_call.1} parent=59 // pred_fallthru
          _
      $region60: #{tpu_custom_call.1} parent=5 // pred_fallthru
        _
    $region6: #{tpu_custom_call.1} parent=1 // loop_footer
      %s18 = sadd.s32 1, %s14
    $region7: #{tpu_custom_call.1} parent=1 // loop_footer_branch
      %13 = sbr.rel target = $region3
    $region8: #{tpu_custom_call.1} parent=1 // loop_exit
      _
    %1000 = vsyncpa [#allocation6], 1
    %s1001 = scalar_lea.sflag [#allocation6], 1
    %1002 = vsyncpa %s1001, 1

</llo_original>
